<compile_context>
chip_gen: v7x
topology: tpu7x:2x2x1
jax: 0.10.0
libtpu: 0.0.40
codegen_flags: <defaults>
</compile_context>

<pallas_src>
import math

import jax
import jax.numpy as jnp
from jax.experimental import pallas as pl
from jax.experimental.pallas import tpu as pltpu


def _round_up(n, m):
    return ((n + m - 1) // m) * m


# --------------------------------------------------------------------------
# Kernel: one batch tile of the fused mean/variance Bayesian MLP forward.
# --------------------------------------------------------------------------
def _bnn_kernel(x_ref, w1_ref, w2_ref, z_ref, out_ref):
    I = x_ref.shape[1]
    H = w1_ref.shape[1] // 2
    O = out_ref.shape[1]

    x = x_ref[...]                                   # (tb, I)
    z = z_ref[...]                                   # (tb, H + O)
    w1 = w1_ref[...]                                 # (2I+1, 2H): [[Wm,0],[0,Wv],[bm,bv]]
    w2 = w2_ref[...]                                 # (2H+1, 2O)

    # ---- layer 1: single MXU pass yields [gamma | delta] ----
    lhs1 = jnp.concatenate([x, x * x], axis=1)       # (tb, 2I)
    r1 = jnp.dot(lhs1, w1[: 2 * I, :],
                 preferred_element_type=jnp.float32) + w1[2 * I: 2 * I + 1, :]
    gamma1 = r1[:, :H]
    delta1 = r1[:, H:]
    h = gamma1 + jnp.sqrt(delta1) * z[:, :H]
    h = jnp.maximum(h, 0.0)                          # ReLU

    # ---- layer 2: single MXU pass ----
    lhs2 = jnp.concatenate([h, h * h], axis=1)       # (tb, 2H)
    r2 = jnp.dot(lhs2, w2[: 2 * H, :],
                 preferred_element_type=jnp.float32) + w2[2 * H: 2 * H + 1, :]
    gamma2 = r2[:, :O]
    delta2 = r2[:, O:]
    out_ref[...] = gamma2 + jnp.sqrt(delta2) * z[:, H:]


# --------------------------------------------------------------------------
# Host-side parameter packing (softplus hoisted out of the kernel).
# --------------------------------------------------------------------------
def _pack_layer(w_mean_t, w_pho_t, b_mean, b_pho):
    """Fused slab (2*in+1, 2*out) = [[W_mean, 0], [0, W_var], [b_mean | b_var]].

    Uses the numerically stable jax.nn.softplus and squares via sp*sp."""
    nin, nout = w_mean_t.shape
    sp_w = jax.nn.softplus(w_pho_t)
    sp_b = jax.nn.softplus(b_pho)
    zeros = jnp.zeros((nin, nout), jnp.float32)
    top = jnp.concatenate([w_mean_t, zeros], axis=1)        # (in, 2out)
    mid = jnp.concatenate([zeros, sp_w * sp_w], axis=1)     # (in, 2out)
    bias = jnp.concatenate([b_mean, sp_b * sp_b], axis=1)   # (1, 2out)
    return jnp.concatenate([top, mid, bias], axis=0)        # (2in+1, 2out)


def pack_params(raw_params):
    """raw params -> two contiguous f32 slabs (cache these while params are frozen)."""
    wm1, wp1, bm1, bp1, wm2, wp2, bm2, bp2 = raw_params
    return (_pack_layer(wm1, wp1, bm1, bp1), _pack_layer(wm2, wp2, bm2, bp2))


# --------------------------------------------------------------------------
# Wrapper: batched forward through one pallas_call.
# --------------------------------------------------------------------------
def bnn_forward(x, packed_params, z, *, block_b=256):
    """x: (B, I) f32; z: (B, H+O) std-normal noise (layer1 cols [:H], layer2 [H:])."""
    w1, w2 = packed_params
    B, I = x.shape
    H = w1.shape[1] // 2
    O = w2.shape[1] // 2
    assert z.shape == (B, H + O)

    # Batch tile: multiple of 8 sublanes, capped so double-buffered activation
    # tiles stay small even under v7x's 64 MiB VMEM.
    tb = min(block_b, _round_up(B, 8))
    b_pad = _round_up(B, tb)
    if b_pad != B:
        pad = ((0, b_pad - B), (0, 0))
        x = jnp.pad(x, pad)
        z = jnp.pad(z, pad)

    out = pl.pallas_call(
        _bnn_kernel,
        out_shape=jax.ShapeDtypeStruct((b_pad, O), jnp.float32),
        grid_spec=pltpu.PrefetchScalarGridSpec(
            num_scalar_prefetch=0,
            grid=(b_pad // tb,),
            in_specs=[
                pl.BlockSpec((tb, I), lambda i: (i, 0)),       # x batch tile
                pl.BlockSpec(w1.shape, lambda i: (0, 0)),      # layer-1 slab (resident)
                pl.BlockSpec(w2.shape, lambda i: (0, 0)),      # layer-2 slab (resident)
                pl.BlockSpec((tb, H + O), lambda i: (i, 0)),   # packed noise tile
            ],
            out_specs=pl.BlockSpec((tb, O), lambda i: (i, 0)),
        ),
        compiler_params=pltpu.CompilerParams(
            dimension_semantics=("parallel",),   # shard batch tiles across v7x cores
            vmem_limit_bytes=32 << 20,
        ),
    )(x, w1, w2, z)
    return out[:B]


# --------------------------------------------------------------------------
# Parameter init mirroring BayesianLinearLayer.__init__ (stored pre-transposed:
# W: (in, out), b: (1, out)).
# --------------------------------------------------------------------------
def make_params(key, input_units, hidden_units, output_units, prior_std=0.5):
    pho0 = math.log(math.exp(prior_std) - 1.0)     # std_to_pho(prior_std)
    k1, k2 = jax.random.split(key)

    wm1 = jax.random.normal(k1, (hidden_units, input_units), jnp.float32).T
    wp1 = jnp.full((input_units, hidden_units), pho0, jnp.float32)
    bm1 = jnp.zeros((1, hidden_units), jnp.float32)
    bp1 = jnp.full((1, hidden_units), pho0, jnp.float32)

    wm2 = jax.random.normal(k2, (output_units, hidden_units), jnp.float32).T
    wp2 = jnp.full((hidden_units, output_units), pho0, jnp.float32)
    bm2 = jnp.zeros((1, output_units), jnp.float32)
    bp2 = jnp.full((1, output_units), pho0, jnp.float32)

    return (wm1, wp1, bm1, bp1, wm2, wp2, bm2, bp2)


def bnn_reference(x, raw_params, z):
    """Pure-JAX reference of the torch forward (same noise layout)."""
    wm1, wp1, bm1, bp1, wm2, wp2, bm2, bp2 = raw_params
    H = wm1.shape[1]
    sp = jax.nn.softplus
    wv1, bv1 = sp(wp1) ** 2, sp(bp1) ** 2
    wv2, bv2 = sp(wp2) ** 2, sp(bp2) ** 2
    g1 = x @ wm1 + bm1
    d1 = (x * x) @ wv1 + bv1
    h = jnp.maximum(g1 + jnp.sqrt(d1) * z[:, :H], 0.0)
    g2 = h @ wm2 + bm2
    d2 = (h * h) @ wv2 + bv2
    return g2 + jnp.sqrt(d2) * z[:, H:]


if __name__ == "__main__":
    B, I, H, O = 2, 8, 32, 4            # batch, input_units, hidden_units, output_units
    key = jax.random.PRNGKey(0)
    k_param, k_x, k_z = jax.random.split(key, 3)

    raw_params = make_params(k_param, I, H, O, prior_std=0.5)
    packed = pack_params(raw_params)    # softplus hoisted + fused slabs (cacheable)

    x = jax.random.normal(k_x, (B, I), jnp.float32)
    z = jax.random.normal(k_z, (B, H + O), jnp.float32)   # per-sample, per-layer noise

    out = bnn_forward(x, packed, z)
    jax.block_until_ready(out)

    assert out.shape == (B, O) and out.dtype == jnp.float32
    assert bool(jnp.all(jnp.isfinite(out)))

    ref = bnn_reference(x, raw_params, z)
    rel_err = float(jnp.max(jnp.abs(out - ref))) / (float(jnp.max(jnp.abs(ref))) + 1e-6)
    assert rel_err < 2e-2, f"mismatch vs reference: rel_err={rel_err}"

    print("KERNEL_OK")
</pallas_src>

<mosaic_0001>
module attributes {stable_mosaic.version = 11 : i64} {
  func.func @_bnn_kernel(%arg0: i32, %arg1: memref<8x8xf32, #tpu.memory_space<vmem>>, %arg2: memref<17x64xf32, #tpu.memory_space<vmem>>, %arg3: memref<65x8xf32, #tpu.memory_space<vmem>>, %arg4: memref<8x36xf32, #tpu.memory_space<vmem>>, %arg5: memref<8x4xf32, #tpu.memory_space<vmem>>) attributes {dimension_semantics = [#tpu.dimension_semantics<parallel>], iteration_bounds = array<i64: 1>, scalar_prefetch = 0 : i64, scratch_operands = 0 : i64, tpu.core_type = #tpu.core_type<tc>, window_params = [{transform_indices = @transform_0, window_bounds = array<i64: 8, 8>}, {pipeline_mode = #tpu.pipeline_mode<synchronous>, transform_indices = @transform_1, window_bounds = array<i64: 17, 64>}, {pipeline_mode = #tpu.pipeline_mode<synchronous>, transform_indices = @transform_2, window_bounds = array<i64: 65, 8>}, {transform_indices = @transform_3, window_bounds = array<i64: 8, 36>}, {transform_indices = @transform_4, window_bounds = array<i64: 8, 4>}]} {
    %c0 = arith.constant 0 : index
    %c0_0 = arith.constant 0 : index
    %0 = vector.load %arg1[%c0, %c0_0] : memref<8x8xf32, #tpu.memory_space<vmem>>, vector<8x8xf32>
    %c0_1 = arith.constant 0 : index
    %c0_2 = arith.constant 0 : index
    %1 = vector.load %arg4[%c0_1, %c0_2] : memref<8x36xf32, #tpu.memory_space<vmem>>, vector<8x36xf32>
    %c0_3 = arith.constant 0 : index
    %c0_4 = arith.constant 0 : index
    %2 = vector.load %arg2[%c0_3, %c0_4] : memref<17x64xf32, #tpu.memory_space<vmem>>, vector<17x64xf32>
    %c0_5 = arith.constant 0 : index
    %c0_6 = arith.constant 0 : index
    %3 = vector.load %arg3[%c0_5, %c0_6] : memref<65x8xf32, #tpu.memory_space<vmem>>, vector<65x8xf32>
    %4 = arith.mulf %0, %0 : vector<8x8xf32>
    %5 = tpu.concatenate %0, %4 in 1 : vector<8x8xf32>, vector<8x8xf32> -> vector<8x16xf32>
    %6 = vector.extract_strided_slice %2 {offsets = [0, 0], sizes = [16, 64], strides = [1, 1]} : vector<17x64xf32> to vector<16x64xf32>
    %cst = arith.constant dense<0.000000e+00> : vector<8x64xf32>
    %7 = tpu.matmul %5, %6, %cst {dimension_numbers = #tpu.dot_dimension_numbers<[1], [0], [0], [1], [0, 0, 1, 1], [], []>} : vector<8x16xf32>, vector<16x64xf32>, vector<8x64xf32> -> vector<8x64xf32>
    %8 = vector.extract_strided_slice %2 {offsets = [16, 0], sizes = [1, 64], strides = [1, 1]} : vector<17x64xf32> to vector<1x64xf32>
    %9 = vector.broadcast %8 : vector<1x64xf32> to vector<8x64xf32>
    %10 = arith.addf %7, %9 : vector<8x64xf32>
    %11 = vector.extract_strided_slice %10 {offsets = [0, 0], sizes = [8, 32], strides = [1, 1]} : vector<8x64xf32> to vector<8x32xf32>
    %12 = vector.extract_strided_slice %10 {offsets = [0, 32], sizes = [8, 32], strides = [1, 1]} : vector<8x64xf32> to vector<8x32xf32>
    %13 = math.sqrt %12 : vector<8x32xf32>
    %14 = vector.extract_strided_slice %1 {offsets = [0, 0], sizes = [8, 32], strides = [1, 1]} : vector<8x36xf32> to vector<8x32xf32>
    %15 = arith.mulf %13, %14 : vector<8x32xf32>
    %16 = arith.addf %11, %15 : vector<8x32xf32>
    %cst_7 = arith.constant 0.000000e+00 : f32
    %17 = vector.broadcast %cst_7 : f32 to vector<8x32xf32>
    %18 = arith.maximumf %16, %17 : vector<8x32xf32>
    %19 = arith.mulf %18, %18 : vector<8x32xf32>
    %20 = tpu.concatenate %18, %19 in 1 : vector<8x32xf32>, vector<8x32xf32> -> vector<8x64xf32>
    %21 = vector.extract_strided_slice %3 {offsets = [0, 0], sizes = [64, 8], strides = [1, 1]} : vector<65x8xf32> to vector<64x8xf32>
    %cst_8 = arith.constant dense<0.000000e+00> : vector<8x8xf32>
    %22 = tpu.matmul %20, %21, %cst_8 {dimension_numbers = #tpu.dot_dimension_numbers<[1], [0], [0], [1], [0, 0, 1, 1], [], []>} : vector<8x64xf32>, vector<64x8xf32>, vector<8x8xf32> -> vector<8x8xf32>
    %23 = vector.extract_strided_slice %3 {offsets = [64, 0], sizes = [1, 8], strides = [1, 1]} : vector<65x8xf32> to vector<1x8xf32>
    %24 = vector.broadcast %23 : vector<1x8xf32> to vector<8x8xf32>
    %25 = arith.addf %22, %24 : vector<8x8xf32>
    %26 = vector.extract_strided_slice %25 {offsets = [0, 0], sizes = [8, 4], strides = [1, 1]} : vector<8x8xf32> to vector<8x4xf32>
    %27 = vector.extract_strided_slice %25 {offsets = [0, 4], sizes = [8, 4], strides = [1, 1]} : vector<8x8xf32> to vector<8x4xf32>
    %28 = math.sqrt %27 : vector<8x4xf32>
    %29 = vector.extract_strided_slice %1 {offsets = [0, 32], sizes = [8, 4], strides = [1, 1]} : vector<8x36xf32> to vector<8x4xf32>
    %30 = arith.mulf %28, %29 : vector<8x4xf32>
    %31 = arith.addf %26, %30 : vector<8x4xf32>
    %c0_9 = arith.constant 0 : index
    %c0_10 = arith.constant 0 : index
    %32 = vector.load %arg5[%c0_9, %c0_10] : memref<8x4xf32, #tpu.memory_space<vmem>>, vector<8x4xf32>
    tpu.vector_store %arg5[%c0_9, %c0_10], %31 {strides = array<i32>} : memref<8x4xf32, #tpu.memory_space<vmem>>, vector<8x4xf32>,
    return
  }
  func.func @transform_0(%arg0: i32) -> (i32, i32) {
    %c0_i32 = arith.constant 0 : i32
    %c0_i32_0 = arith.constant 0 : i32
    return %arg0, %c0_i32 : i32, i32
  }
  func.func @transform_1(%arg0: i32) -> (i32, i32) {
    %c0_i32 = arith.constant 0 : i32
    %c0_i32_0 = arith.constant 0 : i32
    %c0_i32_1 = arith.constant 0 : i32
    return %c0_i32, %c0_i32_0 : i32, i32
  }
  func.func @transform_2(%arg0: i32) -> (i32, i32) {
    %c0_i32 = arith.constant 0 : i32
    %c0_i32_0 = arith.constant 0 : i32
    %c0_i32_1 = arith.constant 0 : i32
    return %c0_i32, %c0_i32_0 : i32, i32
  }
  func.func @transform_3(%arg0: i32) -> (i32, i32) {
    %c0_i32 = arith.constant 0 : i32
    %c0_i32_0 = arith.constant 0 : i32
    return %arg0, %c0_i32 : i32, i32
  }
  func.func @transform_4(%arg0: i32) -> (i32, i32) {
    %c0_i32 = arith.constant 0 : i32
    %c0_i32_0 = arith.constant 0 : i32
    return %arg0, %c0_i32 : i32, i32
  }
}

</mosaic_0001>

<llo_original>
// kernel: tpu_custom_call.1
$region0: #{tpu_custom_call.1}
  #allocation0 [shape = 'u32[]', space=smem, size = 0x4, offset = 0x4, fixed_abs, tag = 'smem constant byte address 0x4 - core index']
  #allocation1 [shape = 'u32[144,128]{1,0:T(1,128)}', space=vmem, size = 0x12000, scoped, tag = 'internal scratch']
  %s0 = inlined_call_operand.vmem [shape: f32[8,8], index: 0, kind: input, shape index: {}]
  %s1 = inlined_call_operand.vmem [shape: f32[17,64], index: 1, kind: input, shape index: {}]
  %s2 = inlined_call_operand.vmem [shape: f32[65,8], index: 2, kind: input, shape index: {}]
  %s3 = inlined_call_operand.vmem [shape: f32[8,36], index: 3, kind: input, shape index: {}]
  %s4 = inlined_call_operand.vmem [shape: f32[8,4], index: 4, kind: output, shape index: {}]
  %s5 = sld [smem:[#allocation0]]
  $region26: #{tpu_custom_call.1} parent=0
    _
  %s7 = ssub.s32 1, %s5
  %s8 = scalar_select 0, %s7, %s5
  // Predicated region
  $region2: #{tpu_custom_call.1} parent=0 // pred_check
    _
  $region3: #{tpu_custom_call.1} parent=0 // pred_check_branch
    %10 = sbr.rel (0) target = $region5
  $region4: #{tpu_custom_call.1} parent=0 // pred_region
    _
  $region5: #{tpu_custom_call.1} parent=0 // pred_fallthru
    _
  // Predicated region
  $region6: #{tpu_custom_call.1} parent=0 // pred_check
    _
  $region7: #{tpu_custom_call.1} parent=0 // pred_check_branch
    %12 = sbr.rel (0) target = $region9
  $region8: #{tpu_custom_call.1} parent=0 // pred_region
    _
  $region9: #{tpu_custom_call.1} parent=0 // pred_fallthru
    _
  // Predicated region
  $region10: #{tpu_custom_call.1} parent=0 // pred_check
    _
  $region11: #{tpu_custom_call.1} parent=0 // pred_check_branch
    %14 = sbr.rel (0) target = $region13
  $region12: #{tpu_custom_call.1} parent=0 // pred_region
    _
  $region13: #{tpu_custom_call.1} parent=0 // pred_fallthru
    _
  // Predicated region
  $region14: #{tpu_custom_call.1} parent=0 // pred_check
    _
  $region15: #{tpu_custom_call.1} parent=0 // pred_check_branch
    %16 = sbr.rel (0) target = $region17
  $region16: #{tpu_custom_call.1} parent=0 // pred_region
    _
  $region17: #{tpu_custom_call.1} parent=0 // pred_fallthru
    _
  %v17 = vld [vmem:[%s0] sm:$0xff]
  %v18 = vld [vmem:[%s3] sm:$0xff]
  %v19 = vld [vmem:[%s1] sm:$0xff]
  %v20 = vld [vmem:[%s1 + $0x8] sm:$0xff]
  %v21 = vld [vmem:[%s1 + $0x10] sm:$0x1]
  %v22 = vld [vmem:[%s2] sm:$0xff]
  %v23 = vld [vmem:[%s2 + $0x8] sm:$0xff]
  %v24 = vld [vmem:[%s2 + $0x10] sm:$0xff]
  %v25 = vld [vmem:[%s2 + $0x18] sm:$0xff]
  %v26 = vld [vmem:[%s2 + $0x20] sm:$0xff]
  %v27 = vld [vmem:[%s2 + $0x28] sm:$0xff]
  %v28 = vld [vmem:[%s2 + $0x30] sm:$0xff]
  %v29 = vld [vmem:[%s2 + $0x38] sm:$0xff]
  %v30 = vld [vmem:[%s2 + $0x40] sm:$0x1]
  %v31 = vmul.f32 %v17, %v17
  %33 = vrot.lane.b32.xlu0 %v31, 8
  %v34 = vpop.permute.xlu0 %33
  %vm36 = vcmask 64512
  %v37 = vsel %vm36, %v17, %v34
  %v38 = vlaneseq
  %v39 = vshrl.u32 %v38, 7
  %v40 = vsub.s32 0, %v39
  %v41 = vrot.slane %v21, %v40
  %vm42 = vcmask 130048
  %v44 = vsel %vm42, %v37, 0
  %46 = vmatprep.subr.mxu0 0.0
  %47 = vmatpush1.msra.mxu0 %v19
  %48 = vmatprep.subr.mxu0 0.0
  %49 = vmatpush1.msra.mxu0 %v20
  %50 = vmatprep.subr.mxu0 0.0
  %51 = vmatpush1.msra.mxu0 0.0
  %52 = vmatprep.subr.mxu0 0.0
  %53 = vmatpush1.msra.mxu0 0.0
  %54 = vmatprep.subr.mxu0 0.0
  %55 = vmatpush1.msra.mxu0 0.0
  %56 = vmatprep.subr.mxu0 0.0
  %57 = vmatpush1.msra.mxu0 0.0
  %58 = vmatprep.subr.mxu0 0.0
  %59 = vmatpush1.msra.mxu0 0.0
  %60 = vmatprep.subr.mxu0 0.0
  %61 = vmatpush1.msra.mxu0 0.0
  %62 = vmatprep.subr.mxu0 0.0
  %63 = vmatpush1.msra.mxu0 0.0
  %64 = vmatprep.subr.mxu0 0.0
  %65 = vmatpush1.msra.mxu0 0.0
  %66 = vmatprep.subr.mxu0 0.0
  %67 = vmatpush1.msra.mxu0 0.0
  %68 = vmatprep.subr.mxu0 0.0
  %69 = vmatpush1.msra.mxu0 0.0
  %70 = vmatprep.subr.mxu0 0.0
  %71 = vmatpush1.msra.mxu0 0.0
  %72 = vmatprep.subr.mxu0 0.0
  %73 = vmatpush1.msra.mxu0 0.0
  %74 = vmatprep.subr.mxu0 0.0
  %75 = vmatpush1.msra.mxu0 0.0
  %76 = vmatprep.subr.mxu0 0.0
  %77 = vmatpush1.msra.mxu0 0.0
  %78 = vmatprep.subr.mxu0 0.0
  %79 = vmatpush1.msra.mxu0 0.0
  %80 = vmatprep.subr.mxu0 0.0
  %81 = vmatpush1.msra.mxu0 0.0
  %82 = vmatprep.subr.mxu0 0.0
  %83 = vmatpush1.msra.mxu0 0.0
  %84 = vmatprep.subr.mxu0 0.0
  %85 = vmatpush1.msra.mxu0 0.0
  %86 = vmatprep.subr.mxu0 0.0
  %87 = vmatpush1.msra.mxu0 0.0
  %88 = vmatprep.subr.mxu0 0.0
  %89 = vmatpush1.msra.mxu0 0.0
  %90 = vmatprep.subr.mxu0 0.0
  %91 = vmatpush1.msra.mxu0 0.0
  %92 = vmatprep.subr.mxu0 0.0
  %93 = vmatpush1.msra.mxu0 0.0
  %94 = vmatprep.subr.mxu0 0.0
  %95 = vmatpush1.msra.mxu0 0.0
  %96 = vmatprep.subr.mxu0 0.0
  %97 = vmatpush1.msra.mxu0 0.0
  %98 = vmatprep.subr.mxu0 0.0
  %99 = vmatpush1.msra.mxu0 0.0
  %100 = vmatprep.subr.mxu0 0.0
  %101 = vmatpush1.msra.mxu0 0.0
  %102 = vmatprep.subr.mxu0 0.0
  %103 = vmatpush1.msra.mxu0 0.0
  %104 = vmatprep.subr.mxu0 0.0
  %105 = vmatpush1.msra.mxu0 0.0
  %106 = vmatprep.subr.mxu0 0.0
  %107 = vmatpush1.msra.mxu0 0.0
  %108 = vmatprep.subr.mxu0 0.0
  %109 = vmatpush1.msra.mxu0 0.0
  %110 = vmatprep.mubr.f32.mxu0 0.0
  %111 = vmatmul.mubr.f32.gmra.mrb[0].mxu0 %v44
  %v112 = vpop.f32.mrb[0].mxu0
  %v113 = vadd.f32 %v41, %v112
  %v114 = vpop.f32.mrb[0].mxu0
  %115 = vdwg.mxu0
  %v116 = vrsqrt.pop %v113
  %v117 = vmul.f32 %v113, %v116
  %vm118 = vcmp.eq.f32.partialorder %v113, inf
  %v119 = vsel %vm118, %v113, %v117
  %vm120 = vcmp.eq.f32.partialorder %v113, 0.0
  %v121 = vand.u32 %v113, 2147483648
  %v122 = vsel %vm120, %v121, %v119
  %124 = vrot.lane.b32.xlu0 %v18, 32
  %v125 = vpop.permute.xlu0 %124
  %v127 = vmul.f32 %v122, %v125
  %129 = vrot.lane.b32.xlu0 %v127, 96
  %v130 = vpop.permute.xlu0 %129
  %v132 = vadd.f32 %v113, %v130
  %v133 = vmax.f32 %v132, 0.0
  %v134 = vmul.f32 %v133, %v133
  %136 = vrot.lane.b32.xlu0 %v134, 32
  %v137 = vpop.permute.xlu0 %136
  %vm139 = vcmask 261120
  %v140 = vsel %vm139, %v133, %v137
  %v141 = vlaneseq
  %v142 = vshrl.u32 %v141, 7
  %v143 = vsub.s32 0, %v142
  %v144 = vrot.slane %v30, %v143
  %vm145 = vcmask 523264
  %v147 = vsel %vm145, %v140, 0
  %149 = vmatprep.subr.mxu0 0.0
  %150 = vmatpush1.msra.mxu0 %v22
  %151 = vmatprep.subr.mxu0 0.0
  %152 = vmatpush1.msra.mxu0 %v23
  %153 = vmatprep.subr.mxu0 0.0
  %154 = vmatpush1.msra.mxu0 %v24
  %155 = vmatprep.subr.mxu0 0.0
  %156 = vmatpush1.msra.mxu0 %v25
  %157 = vmatprep.subr.mxu0 0.0
  %158 = vmatpush1.msra.mxu0 %v26
  %159 = vmatprep.subr.mxu0 0.0
  %160 = vmatpush1.msra.mxu0 %v27
  %161 = vmatprep.subr.mxu0 0.0
  %162 = vmatpush1.msra.mxu0 %v28
  %163 = vmatprep.subr.mxu0 0.0
  %164 = vmatpush1.msra.mxu0 %v29
  %165 = vmatprep.subr.mxu0 0.0
  %166 = vmatpush1.msra.mxu0 0.0
  %167 = vmatprep.subr.mxu0 0.0
  %168 = vmatpush1.msra.mxu0 0.0
  %169 = vmatprep.subr.mxu0 0.0
  %170 = vmatpush1.msra.mxu0 0.0
  %171 = vmatprep.subr.mxu0 0.0
  %172 = vmatpush1.msra.mxu0 0.0
  %173 = vmatprep.subr.mxu0 0.0
  %174 = vmatpush1.msra.mxu0 0.0
  %175 = vmatprep.subr.mxu0 0.0
  %176 = vmatpush1.msra.mxu0 0.0
  %177 = vmatprep.subr.mxu0 0.0
  %178 = vmatpush1.msra.mxu0 0.0
  %179 = vmatprep.subr.mxu0 0.0
  %180 = vmatpush1.msra.mxu0 0.0
  %181 = vmatprep.subr.mxu0 0.0
  %182 = vmatpush1.msra.mxu0 0.0
  %183 = vmatprep.subr.mxu0 0.0
  %184 = vmatpush1.msra.mxu0 0.0
  %185 = vmatprep.subr.mxu0 0.0
  %186 = vmatpush1.msra.mxu0 0.0
  %187 = vmatprep.subr.mxu0 0.0
  %188 = vmatpush1.msra.mxu0 0.0
  %189 = vmatprep.subr.mxu0 0.0
  %190 = vmatpush1.msra.mxu0 0.0
  %191 = vmatprep.subr.mxu0 0.0
  %192 = vmatpush1.msra.mxu0 0.0
  %193 = vmatprep.subr.mxu0 0.0
  %194 = vmatpush1.msra.mxu0 0.0
  %195 = vmatprep.subr.mxu0 0.0
  %196 = vmatpush1.msra.mxu0 0.0
  %197 = vmatprep.subr.mxu0 0.0
  %198 = vmatpush1.msra.mxu0 0.0
  %199 = vmatprep.subr.mxu0 0.0
  %200 = vmatpush1.msra.mxu0 0.0
  %201 = vmatprep.subr.mxu0 0.0
  %202 = vmatpush1.msra.mxu0 0.0
  %203 = vmatprep.subr.mxu0 0.0
  %204 = vmatpush1.msra.mxu0 0.0
  %205 = vmatprep.subr.mxu0 0.0
  %206 = vmatpush1.msra.mxu0 0.0
  %207 = vmatprep.subr.mxu0 0.0
  %208 = vmatpush1.msra.mxu0 0.0
  %209 = vmatprep.subr.mxu0 0.0
  %210 = vmatpush1.msra.mxu0 0.0
  %211 = vmatprep.subr.mxu0 0.0
  %212 = vmatpush1.msra.mxu0 0.0
  %213 = vmatprep.mubr.f32.mxu0 0.0
  %214 = vmatmul.mubr.f32.gmra.mrb[0].mxu0 %v147
  %v215 = vpop.f32.mrb[0].mxu0
  %v216 = vadd.f32 %v144, %v215
  %v217 = vpop.f32.mrb[0].mxu0
  %218 = vdwg.mxu0
  %v219 = vrsqrt.pop %v216
  %v220 = vmul.f32 %v216, %v219
  %vm221 = vcmp.eq.f32.partialorder %v216, inf
  %v222 = vsel %vm221, %v216, %v220
  %vm223 = vcmp.eq.f32.partialorder %v216, 0.0
  %v224 = vand.u32 %v216, 2147483648
  %v225 = vsel %vm223, %v224, %v222
  %226 = vrot.lane.b32.xlu0 %v18, 100
  %v227 = vpop.permute.xlu0 %226
  %v229 = vmul.f32 %v225, %v227
  %231 = vrot.lane.b32.xlu0 %v229, 124
  %v232 = vpop.permute.xlu0 %231
  %v234 = vadd.f32 %v216, %v232
  %vm235 = vcmask 31744
  %236 = vst.msk [vmem:[%s4] sm:$0xff] %vm235, %v234
  // Predicated region
  $region18: #{tpu_custom_call.1} parent=0 // pred_check
    _
  $region19: #{tpu_custom_call.1} parent=0 // pred_check_branch
    %238 = sbr.rel (0) target = $region21
  $region20: #{tpu_custom_call.1} parent=0 // pred_region
    _
  $region21: #{tpu_custom_call.1} parent=0 // pred_fallthru
    _
  // Predicated region
  $region22: #{tpu_custom_call.1} parent=0 // pred_check
    _
  $region23: #{tpu_custom_call.1} parent=0 // pred_check_branch
    %240 = sbr.rel (0) target = $region25
  $region24: #{tpu_custom_call.1} parent=0 // pred_region
    _
  $region25: #{tpu_custom_call.1} parent=0 // pred_fallthru
    _

</llo_original>
